<compile_context>
chip_gen: v6e
topology: v6e:2x2x1
jax: 0.10.0
libtpu: 0.0.40
codegen_flags: <defaults>
</compile_context>

<pallas_src>
import functools

import jax
import jax.numpy as jnp
from jax.experimental import pallas as pl
from jax.experimental.pallas import tpu as pltpu

_LANE = 128


# --------------------------------------------------------------------------
# VMEM budgeting
# --------------------------------------------------------------------------
def _vmem_capacity_bytes():
    """Physical VMEM of the local TPU; conservative fallback if unknown."""
    try:
        return int(pltpu.get_tpu_info().vmem_capacity_bytes)
    except Exception:
        return 64 * 1024 * 1024  # v7x-sized fallback; safe on all generations


def _budgets():
    cap = _vmem_capacity_bytes()
    # Scoped VMEM limit we ask the compiler for (headroom below physical).
    vmem_limit = min(int(cap * 0.75), 100 * 1024 * 1024)
    # Per-sample threshold for the single-pass fused path (in+out, f32 view,
    # double buffered across N must fit with room to spare).
    fused_threshold = min(cap // 6, 16 * 1024 * 1024)
    return vmem_limit, fused_threshold


def _choose_tiles(nc, f, vmem_limit):
    """Row/lane tile for the tiled two-pass path on the (N*C, F) view."""
    if nc < 8:
        tr = nc                                   # block dim == full array dim
    else:
        tr = min((nc // 8) * 8, 64)               # multiple of 8 sublanes
    # Target multi-MiB blocks: 2 buffers x (in + out) x block must fit the
    # scoped limit with headroom -> block ~ limit/6, clamped to [1, 8] MiB.
    blk_target = max(1 << 20, min(vmem_limit // 6, 8 << 20))
    tf = blk_target // (max(tr, 1) * 4)
    tf = max(_LANE, (tf // _LANE) * _LANE)
    f_ceil = ((f + _LANE - 1) // _LANE) * _LANE
    tf = min(tf, f_ceil)
    return tr, tf


# --------------------------------------------------------------------------
# Kernels
# --------------------------------------------------------------------------
def _fused_kernel(x_ref, w_ref, b_ref, o_ref, *, eps):
    """Whole (C, F) sample resident in VMEM: stats + normalize in one pass."""
    x = x_ref[...].astype(jnp.float32)                  # (C, F)
    mean = jnp.mean(x)
    var = jnp.mean(jnp.square(x - mean))                # centered: no cancellation
    inv_std = jax.lax.rsqrt(var + jnp.float32(eps))
    scale = w_ref[...].astype(jnp.float32) * inv_std    # (C, 1)
    shift = b_ref[...].astype(jnp.float32) - mean * scale
    o_ref[...] = (x * scale + shift).astype(o_ref.dtype)


def _stats_kernel(x_ref, sum_ref, sq_ref, *, f_total, need_mask):
    """Accumulate per-row sum(x) and sum(x*x) across the F-tile grid axis."""
    f = pl.program_id(1)

    @pl.when(f == 0)
    def _():
        sum_ref[...] = jnp.zeros_like(sum_ref)
        sq_ref[...] = jnp.zeros_like(sq_ref)

    x = x_ref[...].astype(jnp.float32)                  # (tr, tf)
    if need_mask:
        tf = x.shape[1]
        lane = jax.lax.broadcasted_iota(jnp.int32, x.shape, 1) + f * tf
        x = jnp.where(lane < f_total, x, 0.0)           # zero the OOB lane tail
    sum_ref[...] += jnp.sum(x, axis=1, keepdims=True)   # (tr, 1)
    sq_ref[...] += jnp.sum(x * x, axis=1, keepdims=True)


def _norm_kernel(x_ref, scale_ref, shift_ref, o_ref):
    """out = x * scale + shift; scale/shift are per (sample, channel) row."""
    x = x_ref[...].astype(jnp.float32)                  # (tr, tf)
    o_ref[...] = (x * scale_ref[...] + shift_ref[...]).astype(o_ref.dtype)


# --------------------------------------------------------------------------
# Wrapper
# --------------------------------------------------------------------------
def global_layer_norm(x, weight=None, bias=None, eps=1e-8, max_fused_bytes=None):
    """Pallas GlobalLayerNorm.  x: [N, C, K, S] or [N, C, L]."""
    orig_shape = x.shape
    if x.ndim == 4:
        N, C, K, S = x.shape
        F = K * S
    elif x.ndim == 3:
        N, C, F = x.shape
    else:
        raise ValueError(f"expected 3D or 4D input, got {x.ndim}D")

    vmem_limit, fused_threshold = _budgets()
    if max_fused_bytes is not None:
        fused_threshold = max_fused_bytes

    # Affine params handled independently (either may be None).
    w = (jnp.ones((C,), jnp.float32) if weight is None
         else weight.reshape(C).astype(jnp.float32))
    b = (jnp.zeros((C,), jnp.float32) if bias is None
         else bias.reshape(C).astype(jnp.float32))

    x3 = x.reshape(N, C, F)
    sample_bytes = C * F * 4  # f32 view

    # ---------------- single-pass fused fast path ----------------
    if sample_bytes <= fused_threshold:
        out = pl.pallas_call(
            functools.partial(_fused_kernel, eps=eps),
            out_shape=jax.ShapeDtypeStruct((N, C, F), x.dtype),
            grid_spec=pltpu.PrefetchScalarGridSpec(
                num_scalar_prefetch=0,
                grid=(N,),
                in_specs=[
                    pl.BlockSpec((None, C, F), lambda n: (n, 0, 0)),
                    pl.BlockSpec((C, 1), lambda n: (0, 0)),
                    pl.BlockSpec((C, 1), lambda n: (0, 0)),
                ],
                out_specs=pl.BlockSpec((None, C, F), lambda n: (n, 0, 0)),
            ),
            compiler_params=pltpu.CompilerParams(
                dimension_semantics=("parallel",),
                vmem_limit_bytes=vmem_limit),
        )(x3, w.reshape(C, 1), b.reshape(C, 1))
        return out.reshape(orig_shape)

    # ---------------- tiled two-pass path (large inputs) ----------------
    NC = N * C
    x2 = x3.reshape(NC, F)
    tr, tf = _choose_tiles(NC, F, vmem_limit)
    num_r = pl.cdiv(NC, tr)
    num_f = pl.cdiv(F, tf)
    need_mask = (F % tf) != 0

    # Pass 1: per-(n, c) row partial sums, single traversal of x.
    ssum, ssq = pl.pallas_call(
        functools.partial(_stats_kernel, f_total=F, need_mask=need_mask),
        out_shape=(jax.ShapeDtypeStruct((NC, 1), jnp.float32),
                   jax.ShapeDtypeStruct((NC, 1), jnp.float32)),
        grid_spec=pltpu.PrefetchScalarGridSpec(
            num_scalar_prefetch=0,
            grid=(num_r, num_f),
            in_specs=[pl.BlockSpec((tr, tf), lambda r, f: (r, f))],
            out_specs=(pl.BlockSpec((tr, 1), lambda r, f: (r, 0)),
                       pl.BlockSpec((tr, 1), lambda r, f: (r, 0))),
        ),
        compiler_params=pltpu.CompilerParams(
            dimension_semantics=("parallel", "arbitrary"),
            vmem_limit_bytes=vmem_limit),
    )(x2)

    # Tiny per-sample scalar epilogue in plain JAX (N*C elements).
    n_elems = jnp.float32(C * F)
    s_n = jnp.sum(ssum.reshape(N, C), axis=1, keepdims=True)    # (N, 1)
    q_n = jnp.sum(ssq.reshape(N, C), axis=1, keepdims=True)     # (N, 1)
    mean = s_n / n_elems
    var = jnp.maximum(q_n / n_elems - mean * mean, 0.0)
    inv_std = jax.lax.rsqrt(var + jnp.float32(eps))
    scale = w[None, :] * inv_std                                 # (N, C)
    shift = b[None, :] - mean * scale                            # (N, C)
    scale = scale.reshape(NC, 1)
    shift = shift.reshape(NC, 1)

    # Pass 2: out = x * scale + shift, both grid axes parallel.
    out = pl.pallas_call(
        _norm_kernel,
        out_shape=jax.ShapeDtypeStruct((NC, F), x.dtype),
        grid_spec=pltpu.PrefetchScalarGridSpec(
            num_scalar_prefetch=0,
            grid=(num_r, num_f),
            in_specs=[
                pl.BlockSpec((tr, tf), lambda r, f: (r, f)),
                pl.BlockSpec((tr, 1), lambda r, f: (r, 0)),
                pl.BlockSpec((tr, 1), lambda r, f: (r, 0)),
            ],
            out_specs=pl.BlockSpec((tr, tf), lambda r, f: (r, f)),
        ),
        compiler_params=pltpu.CompilerParams(
            dimension_semantics=("parallel", "parallel"),
            vmem_limit_bytes=vmem_limit),
    )(x2, scale, shift)

    return out.reshape(orig_shape)


# --------------------------------------------------------------------------
# Reference + self-test
# --------------------------------------------------------------------------
def _reference(x, weight=None, bias=None, eps=1e-8):
    axes = tuple(range(1, x.ndim))
    mean = jnp.mean(x, axes, keepdims=True)
    var = jnp.mean((x - mean) ** 2, axes, keepdims=True)
    y = (x - mean) / jnp.sqrt(var + eps)
    if weight is not None:
        y = weight.reshape((1, -1) + (1,) * (x.ndim - 2)) * y
    if bias is not None:
        y = y + bias.reshape((1, -1) + (1,) * (x.ndim - 2))
    return y


if __name__ == "__main__":
    key = jax.random.PRNGKey(0)
    k1, k2, k3, k4, k5 = jax.random.split(key, 5)

    # 4D case [N, C, K, S] (as produced by dual-path blocks) — fused fast path.
    N, C, K, S = 2, 4, 16, 16
    x4 = jax.random.normal(k1, (N, C, K, S), dtype=jnp.float32)
    weight = 1.0 + 0.1 * jax.random.normal(k2, (C, 1, 1), dtype=jnp.float32)
    bias = 0.1 * jax.random.normal(k3, (C, 1, 1), dtype=jnp.float32)

    ref4 = _reference(x4, weight, bias)
    out4 = jax.block_until_ready(global_layer_norm(x4, weight, bias))
    assert jnp.allclose(out4, ref4, atol=1e-5, rtol=1e-5)

    # Same data through the tiled two-pass path (forced) — F is tile-aligned.
    out4t = jax.block_until_ready(
        global_layer_norm(x4, weight, bias, max_fused_bytes=0))
    assert jnp.allclose(out4t, ref4, atol=1e-5, rtol=1e-5)

    # 3D case [N, C, L] with L not a multiple of 128 — exercises the masked
    # edge-tile path of the tiled stats kernel as well as the fused path.
    L = 100
    x3 = jax.random.normal(k4, (N, C, L), dtype=jnp.float32)
    w3 = weight.reshape(C, 1)
    b3 = bias.reshape(C, 1)
    ref3 = _reference(x3, w3, b3)
    out3 = jax.block_until_ready(global_layer_norm(x3, w3, b3))
    assert jnp.allclose(out3, ref3, atol=1e-5, rtol=1e-5)
    out3t = jax.block_until_ready(
        global_layer_norm(x3, w3, b3, max_fused_bytes=0))
    assert jnp.allclose(out3t, ref3, atol=1e-5, rtol=1e-5)

    # No-affine case (elementwise_affine=False).
    x5 = jax.random.normal(k5, (N, C, 128), dtype=jnp.float32)
    ref5 = _reference(x5)
    out5 = jax.block_until_ready(global_layer_norm(x5))
    assert jnp.allclose(out5, ref5, atol=1e-5, rtol=1e-5)

    print("KERNEL_OK")
</pallas_src>

<mosaic_0001>
module attributes {stable_mosaic.version = 11 : i64} {
  func.func @_fused_kernel(%arg0: i32, %arg1: memref<1x4x256xf32, #tpu.memory_space<vmem>>, %arg2: memref<4x1xf32, #tpu.memory_space<vmem>>, %arg3: memref<4x1xf32, #tpu.memory_space<vmem>>, %arg4: memref<1x4x256xf32, #tpu.memory_space<vmem>>) attributes {dimension_semantics = [#tpu.dimension_semantics<parallel>], iteration_bounds = array<i64: 2>, scalar_prefetch = 0 : i64, scratch_operands = 0 : i64, tpu.core_type = #tpu.core_type<tc>, window_params = [{transform_indices = @transform_0, window_bounds = array<i64: 1, 4, 256>}, {pipeline_mode = #tpu.pipeline_mode<synchronous>, transform_indices = @transform_1, window_bounds = array<i64: 4, 1>}, {pipeline_mode = #tpu.pipeline_mode<synchronous>, transform_indices = @transform_2, window_bounds = array<i64: 4, 1>}, {transform_indices = @transform_3, window_bounds = array<i64: 1, 4, 256>}]} {
    %c0 = arith.constant 0 : index
    %c0_0 = arith.constant 0 : index
    %c0_1 = arith.constant 0 : index
    %0 = vector.load %arg1[%c0, %c0_0, %c0_1] : memref<1x4x256xf32, #tpu.memory_space<vmem>>, vector<1x4x256xf32>
    %1 = vector.shape_cast %0 : vector<1x4x256xf32> to vector<4x256xf32>
    %2 = vector.shape_cast %1 : vector<4x256xf32> to vector<1x4x256xf32>
    %cst = arith.constant dense<0.000000e+00> : vector<1xf32>
    %3 = vector.multi_reduction <add>, %2, %cst [1, 2] : vector<1x4x256xf32> to vector<1xf32>
    %4 = vector.shape_cast %3 : vector<1xf32> to vector<1x1x1xf32>
    %5 = vector.extract %4[0, 0, 0] : f32 from vector<1x1x1xf32>
    %cst_2 = arith.constant 1.024000e+03 : f32
    %6 = arith.divf %5, %cst_2 : f32
    %7 = vector.broadcast %6 : f32 to vector<4x256xf32>
    %8 = arith.subf %1, %7 : vector<4x256xf32>
    %9 = arith.mulf %8, %8 : vector<4x256xf32>
    %10 = vector.shape_cast %9 : vector<4x256xf32> to vector<1x4x256xf32>
    %cst_3 = arith.constant dense<0.000000e+00> : vector<1xf32>
    %11 = vector.multi_reduction <add>, %10, %cst_3 [1, 2] : vector<1x4x256xf32> to vector<1xf32>
    %12 = vector.shape_cast %11 : vector<1xf32> to vector<1x1x1xf32>
    %13 = vector.extract %12[0, 0, 0] : f32 from vector<1x1x1xf32>
    %cst_4 = arith.constant 1.024000e+03 : f32
    %14 = arith.divf %13, %cst_4 : f32
    %cst_5 = arith.constant 9.99999993E-9 : f32
    %15 = arith.addf %14, %cst_5 : f32
    %16 = math.rsqrt %15 : f32
    %c0_6 = arith.constant 0 : index
    %c0_7 = arith.constant 0 : index
    %17 = vector.load %arg2[%c0_6, %c0_7] : memref<4x1xf32, #tpu.memory_space<vmem>>, vector<4x1xf32>
    %18 = vector.broadcast %16 : f32 to vector<4x1xf32>
    %19 = arith.mulf %17, %18 : vector<4x1xf32>
    %c0_8 = arith.constant 0 : index
    %c0_9 = arith.constant 0 : index
    %20 = vector.load %arg3[%c0_8, %c0_9] : memref<4x1xf32, #tpu.memory_space<vmem>>, vector<4x1xf32>
    %21 = vector.broadcast %6 : f32 to vector<4x1xf32>
    %22 = arith.mulf %21, %19 : vector<4x1xf32>
    %23 = arith.subf %20, %22 : vector<4x1xf32>
    %24 = vector.broadcast %19 : vector<4x1xf32> to vector<4x256xf32>
    %25 = arith.mulf %1, %24 : vector<4x256xf32>
    %26 = vector.broadcast %23 : vector<4x1xf32> to vector<4x256xf32>
    %27 = arith.addf %25, %26 : vector<4x256xf32>
    %c0_10 = arith.constant 0 : index
    %c0_11 = arith.constant 0 : index
    %c0_12 = arith.constant 0 : index
    %28 = vector.load %arg4[%c0_10, %c0_11, %c0_12] : memref<1x4x256xf32, #tpu.memory_space<vmem>>, vector<1x4x256xf32>
    %29 = vector.shape_cast %28 : vector<1x4x256xf32> to vector<4x256xf32>
    %30 = vector.shape_cast %27 : vector<4x256xf32> to vector<1x4x256xf32>
    tpu.vector_store %arg4[%c0_10, %c0_11, %c0_12], %30 {strides = array<i32>} : memref<1x4x256xf32, #tpu.memory_space<vmem>>, vector<1x4x256xf32>,
    return
  }
  func.func @transform_0(%arg0: i32) -> (i32, i32, i32) {
    %c0_i32 = arith.constant 0 : i32
    %c0_i32_0 = arith.constant 0 : i32
    %c0_i32_1 = arith.constant 0 : i32
    return %arg0, %c0_i32, %c0_i32_0 : i32, i32, i32
  }
  func.func @transform_1(%arg0: i32) -> (i32, i32) {
    %c0_i32 = arith.constant 0 : i32
    %c0_i32_0 = arith.constant 0 : i32
    %c0_i32_1 = arith.constant 0 : i32
    return %c0_i32, %c0_i32_0 : i32, i32
  }
  func.func @transform_2(%arg0: i32) -> (i32, i32) {
    %c0_i32 = arith.constant 0 : i32
    %c0_i32_0 = arith.constant 0 : i32
    %c0_i32_1 = arith.constant 0 : i32
    return %c0_i32, %c0_i32_0 : i32, i32
  }
  func.func @transform_3(%arg0: i32) -> (i32, i32, i32) {
    %c0_i32 = arith.constant 0 : i32
    %c0_i32_0 = arith.constant 0 : i32
    %c0_i32_1 = arith.constant 0 : i32
    return %arg0, %c0_i32, %c0_i32_0 : i32, i32, i32
  }
}

</mosaic_0001>

<llo_original>
// kernel: tpu_custom_call.1
$region0: #{tpu_custom_call.1}
  #allocation0 [shape = 'u32[]', space=smem, size = 0x4, offset = 0x4, fixed_abs, tag = 'smem constant byte address 0x4 - core index']
  #allocation1 [shape = 'u32[144,128]{1,0:T(1,128)}', space=vmem, size = 0x12000, scoped, tag = 'internal scratch']
  %s0 = inlined_call_operand.hbm [shape: f32[2,4,256], index: 0, kind: input, shape index: {}]
  %s1 = inlined_call_operand.vmem [shape: f32[4,1], index: 1, kind: input, shape index: {}]
  %s2 = inlined_call_operand.vmem [shape: f32[4,1], index: 2, kind: input, shape index: {}]
  %s3 = inlined_call_operand.hbm [shape: f32[2,4,256], index: 3, kind: output, shape index: {}]
  %s4 = sld [smem:[#allocation0]]
  $region49: #{tpu_custom_call.1} parent=0
    _
  %s6 = ssub.s32 1, %s4
  %s7 = scalar_select 0, %s6, %s4
  $region1: #{tpu_custom_call.1} parent=0
    #allocation2 [shape = 'u8[8192]{0}', space=vmem, size = 0x2000, scoped, tag = 'input window, operand 0']
    #allocation3 [shape = 's32[2]{0}', space=sflag, size = 0x8, scoped, tag = 'scoped memory for tpu_custom_call.1']
    #allocation4 [shape = 's32[2]{0}', space=sflag, size = 0x8, scoped, tag = 'scoped memory for tpu_custom_call.1']
    #allocation5 [shape = 'u8[8192]{0}', space=vmem, size = 0x2000, scoped, tag = 'output window, operand 0']
    %8 = vsyncpa [#allocation3], 0
    %s9 = scalar_lea.sflag [#allocation3], 1
    %10 = vsyncpa %s9, 0
    %11 = vsyncpa [#allocation4], 0
    %s12 = scalar_lea.sflag [#allocation4], 1
    %13 = vsyncpa %s12, 0
    loop: start=0, step=1, limit=4
    $region2: #{tpu_custom_call.1} parent=1 // loop_pre_header
      _
    $region3: #{tpu_custom_call.1} parent=1 // loop_header
      %s15 = sphi 0, %s19
      %p16 = scmp.ge.s32.totalorder %s15, 4
      %s25 = sphi 0, %s27
      %s28 = sphi 0, %s25
      %s29 = sphi 0, %s28
      %s45 = sphi 0, %s29
      %s49 = sphi 0, %s49
      %s51 = sphi 0, %s49
      %s52 = sphi 0, %s51
      %s66 = sphi 0, %s52
      %s70 = sphi 0, %s70
      %s72 = sphi 0, %s70
      %s73 = sphi 0, %s72
      %s87 = sphi 0, %s73
      %s93 = sphi 0, %s95
      %s96 = sphi 0, %s93
      %s97 = sphi 0, %s96
      %s113 = sphi 0, %s97
    $region4: #{tpu_custom_call.1} parent=1 // loop_header_branch
      %18 = sbr.rel (%p16) target = $region8
    $region5: #{tpu_custom_call.1} parent=1 // loop_body
      %s20 = ssub.s32 %s15, 1
      %s21 = ssub.s32 %s15, 2
      %s22 = sadd.s32 %s15, 1
      %s23 = ssub.s32 %s15, %s22
      %p24 = scmp.eq.s32.totalorder %s23, 0
      %s26 = sadd.s32 %s25, 1
      %s27 = scalar_select %p24, %s25, %s26
      %p30 = pneg %p24
      %p31 = scmp.eq.s32.totalorder %s15, 1
      %p32 = por %p30, %p31
      %p33 = scmp.ne.s32.totalorder %s25, %s28
      %p34 = scmp.eq.s32.totalorder %s15, 0
      %p35 = por %p33, %p34
      %p36 = scmp.ne.s32.totalorder %s25, %s28
      %p37 = scmp.eq.s32.totalorder %s20, 1
      %p38 = por %p36, %p37
      %p39 = scmp.ne.s32.totalorder %s28, %s29
      %p40 = scmp.eq.s32.totalorder %s20, 0
      %p41 = por %p39, %p40
      %p42 = scmp.ne.s32.totalorder %s28, %s29
      %p43 = scmp.eq.s32.totalorder %s21, 1
      %p44 = por %p42, %p43
      %p46 = scmp.ne.s32.totalorder %s29, %s45
      %p47 = scmp.eq.s32.totalorder %s21, 0
      %p48 = por %p46, %p47
      %s50 = sadd.s32 %s49, 1
      %p53 = scmp.eq.s32.totalorder %s15, 1
      %p54 = scmp.ne.s32.totalorder %s49, %s51
      %p55 = scmp.eq.s32.totalorder %s15, 0
      %p56 = por %p54, %p55
      %p57 = scmp.ne.s32.totalorder %s49, %s51
      %p58 = scmp.eq.s32.totalorder %s20, 1
      %p59 = por %p57, %p58
      %p60 = scmp.ne.s32.totalorder %s51, %s52
      %p61 = scmp.eq.s32.totalorder %s20, 0
      %p62 = por %p60, %p61
      %p63 = scmp.ne.s32.totalorder %s51, %s52
      %p64 = scmp.eq.s32.totalorder %s21, 1
      %p65 = por %p63, %p64
      %p67 = scmp.ne.s32.totalorder %s52, %s66
      %p68 = scmp.eq.s32.totalorder %s21, 0
      %p69 = por %p67, %p68
      %s71 = sadd.s32 %s70, 1
      %p74 = scmp.eq.s32.totalorder %s15, 1
      %p75 = scmp.ne.s32.totalorder %s70, %s72
      %p76 = scmp.eq.s32.totalorder %s15, 0
      %p77 = por %p75, %p76
      %p78 = scmp.ne.s32.totalorder %s70, %s72
      %p79 = scmp.eq.s32.totalorder %s20, 1
      %p80 = por %p78, %p79
      %p81 = scmp.ne.s32.totalorder %s72, %s73
      %p82 = scmp.eq.s32.totalorder %s20, 0
      %p83 = por %p81, %p82
      %p84 = scmp.ne.s32.totalorder %s72, %s73
      %p85 = scmp.eq.s32.totalorder %s21, 1
      %p86 = por %p84, %p85
      %p88 = scmp.ne.s32.totalorder %s73, %s87
      %p89 = scmp.eq.s32.totalorder %s21, 0
      %p90 = por %p88, %p89
      %s91 = ssub.s32 %s15, %s22
      %p92 = scmp.eq.s32.totalorder %s91, 0
      %s94 = sadd.s32 %s93, 1
      %s95 = scalar_select %p92, %s93, %s94
      %p98 = pneg %p92
      %p99 = scmp.eq.s32.totalorder %s15, 1
      %p100 = por %p98, %p99
      %p101 = scmp.ne.s32.totalorder %s93, %s96
      %p102 = scmp.eq.s32.totalorder %s15, 0
      %p103 = por %p101, %p102
      %p104 = scmp.ne.s32.totalorder %s93, %s96
      %p105 = scmp.eq.s32.totalorder %s20, 1
      %p106 = por %p104, %p105
      %p107 = scmp.ne.s32.totalorder %s96, %s97
      %p108 = scmp.eq.s32.totalorder %s20, 0
      %p109 = por %p107, %p108
      %p110 = scmp.ne.s32.totalorder %s96, %s97
      %p111 = scmp.eq.s32.totalorder %s21, 1
      %p112 = por %p110, %p111
      %p114 = scmp.ne.s32.totalorder %s97, %s113
      %p115 = scmp.eq.s32.totalorder %s21, 0
      %p116 = por %p114, %p115
      %p117 = scmp.le.s32.totalorder 1, %s15
      %p118 = scmp.lt.s32.totalorder %s15, 3
      %p119 = pnand %p117, %p118
      %p120 = pneg %p119
      // Predicated region
      $region9: #{tpu_custom_call.1} parent=5 // pred_check
        _
      $region10: #{tpu_custom_call.1} parent=5 // pred_check_branch
        %122 = sbr.rel (%p119) target = $region12
      $region11: #{tpu_custom_call.1} parent=5 // pred_region
        %s123 = ssub.s32 %s15, 1
        // Predicated region
        $region13: #{tpu_custom_call.1} parent=11 // pred_check
          %p124 = pneg %p62
        $region14: #{tpu_custom_call.1} parent=11 // pred_check_branch
          %126 = sbr.rel (%p124) target = $region16
        $region15: #{tpu_custom_call.1} parent=11 // pred_region
          _
        $region16: #{tpu_custom_call.1} parent=11 // pred_fallthru
          _
        // Predicated region
        $region17: #{tpu_custom_call.1} parent=11 // pred_check
          %p127 = pneg %p83
        $region18: #{tpu_custom_call.1} parent=11 // pred_check_branch
          %129 = sbr.rel (%p127) target = $region20
        $region19: #{tpu_custom_call.1} parent=11 // pred_region
          _
        $region20: #{tpu_custom_call.1} parent=11 // pred_fallthru
          _
      $region12: #{tpu_custom_call.1} parent=5 // pred_fallthru
        _
      %p130 = scmp.lt.s32.totalorder %s15, 2
      // Predicated region
      $region21: #{tpu_custom_call.1} parent=5 // pred_check
        %p131 = pneg %p130
      $region22: #{tpu_custom_call.1} parent=5 // pred_check_branch
        %133 = sbr.rel (%p131) target = $region24
      $region23: #{tpu_custom_call.1} parent=5 // pred_region
        // Predicated region
        $region25: #{tpu_custom_call.1} parent=23 // pred_check
          %p134 = pneg %p35
        $region26: #{tpu_custom_call.1} parent=23 // pred_check_branch
          %136 = sbr.rel (%p134) target = $region28
        $region27: #{tpu_custom_call.1} parent=23 // pred_region
          %s137 = sand.u32 %s25, 1
          %s138 = scalar_lea.sflag [#allocation3], %s137
          %s139 = sand.u32 %s25, 1
          %s140 = smul.addr %s139, 8
          %s141 = scalar_lea.vmem [#allocation2], %s140
          %s143 = ssub.s32 128, 128
          %144 = vsyncadd %s138, %s143
          %s145 = smul.addr %s15, 2
          %s146 = smul.addr %s145, 64
          %s147 = scalar_lea.hbm %s0, %s146
          %s149 = sshll.u32 %s141, 4
          %s150 = int_to_ptr.vmem [resolvable:$true] %s149
          %152 = dma.hbm_to_vmem [thread:$0]  %s147, 128, %s150, %s138
        $region28: #{tpu_custom_call.1} parent=23 // pred_fallthru
          _
      $region24: #{tpu_custom_call.1} parent=5 // pred_fallthru
        _
      %p153 = scmp.le.s32.totalorder 1, %s15
      %p154 = scmp.lt.s32.totalorder %s15, 3
      %p155 = pnand %p153, %p154
      %p156 = pneg %p155
      // Predicated region
      $region29: #{tpu_custom_call.1} parent=5 // pred_check
        _
      $region30: #{tpu_custom_call.1} parent=5 // pred_check_branch
        %158 = sbr.rel (%p155) target = $region32
      $region31: #{tpu_custom_call.1} parent=5 // pred_region
        %s159 = ssub.s32 %s15, 1
        %s160 = sand.u32 %s28, 1
        %s161 = scalar_lea.sflag [#allocation3], %s160
        %s162 = sand.u32 %s28, 1
        %s163 = smul.addr %s162, 8
        %s164 = scalar_lea.vmem [#allocation2], %s163
        // Predicated region
        $region33: #{tpu_custom_call.1} parent=31 // pred_check
          %p165 = pneg %p41
        $region34: #{tpu_custom_call.1} parent=31 // pred_check_branch
          %167 = sbr.rel (%p165) target = $region36
        $region35: #{tpu_custom_call.1} parent=31 // pred_region
          %168 = dma.done %s161, 128
        $region36: #{tpu_custom_call.1} parent=31 // pred_fallthru
          _
        %s169 = sand.u32 %s28, 1
        %s170 = scalar_lea.sflag [#allocation3], %s169
        %s171 = sand.u32 %s28, 1
        %s172 = smul.addr %s171, 8
        %s173 = scalar_lea.vmem [#allocation2], %s172
        %p174 = pneg %p41
        %p175 = pneg %p38
        %p176 = pneg %p62
        %p177 = pneg %p59
        %p178 = pneg %p83
        %p179 = pneg %p80
        %p180 = pneg %p109
        %p181 = pneg %p106
        %s182 = sand.u32 %s96, 1
        %s183 = scalar_lea.sflag [#allocation4], %s182
        %s184 = sand.u32 %s96, 1
        %s185 = smul.addr %s184, 8
        %s186 = scalar_lea.vmem [#allocation5], %s185
        %v187 = vld [vmem:[%s164] sm:$0xff]
        %v189 = vcombine.high %v187, %v187
        %vm191 = vcmask 1043456
        %v192 = vsel %vm191, %v187, 0.0
        %v193 = vsel %vm191, %v189, 0.0
        %v194 = vadd.f32 %v192, %v193
        %195 = vadd.xlane.f32.xlu0 %v194
        %v196 = vpop.xlane.xlu0 %195
        %v197 = vrot.slane %v196, 4
        %v198 = vadd.f32 %v196, %v197
        %v199 = vrot.slane %v198, 2
        %v200 = vadd.f32 %v198, %v199
        %v201 = vrot.slane %v200, 1
        %v202 = vadd.f32 %v200, %v201
        %s203 = vtos %v202
        %v204 = vrcp.pop 1024.0
        %s205 = vtos %v204
        %s206 = smul.f32 %s203, %s205
        %v207 = vstv %s206
        %v208 = vsub.f32 %v187, %v207
        %v209 = vmul.f32 %v208, %v208
        %v211 = vcombine.high %v209, %v209
        %v213 = vsel %vm191, %v209, 0.0
        %v214 = vsel %vm191, %v211, 0.0
        %v215 = vadd.f32 %v213, %v214
        %216 = vadd.xlane.f32.xlu0 %v215
        %v217 = vpop.xlane.xlu0 %216
        %v218 = vrot.slane %v217, 4
        %v219 = vadd.f32 %v217, %v218
        %v220 = vrot.slane %v219, 2
        %v221 = vadd.f32 %v219, %v220
        %v222 = vrot.slane %v221, 1
        %v223 = vadd.f32 %v221, %v222
        %s224 = vtos %v223
        %v225 = vrcp.pop 1024.0
        %s226 = vtos %v225
        %s227 = smul.f32 %s224, %s226
        %s228 = sadd.f32 %s227, 1e-08
        %v229 = vstv %s228
        %v230 = vrsqrt.pop %v229
        %s231 = vtos %v230
        %v232 = vld [vmem:[%s1] sm:$0xf]
        %v233 = vstv %s231
        %v234 = vmul.f32 %v232, %v233
        %v235 = vld [vmem:[%s2] sm:$0xf]
        %v236 = vmul.f32 %v207, %v234
        %v237 = vsub.f32 %v235, %v236
        %239 = vset.pattern.permute.xlu0 0
        %240 = vperm.xlu0 %239, %v234
        %v241 = vpop.permute.xlu0 %240
        %v243 = vunpack.c.l.s4 839922192
        %v244 = vunpack.c.0.s8 %v243
        %v245 = vlaneseq
        %v246 = vshrl.u32 %v245, 7
        %v247 = vsub.s32 %v244, %v246
        %v248 = vrot.slane %v241, %v247
        %v250 = vmul.f32 %v187, %v248
        %252 = vset.pattern.permute.xlu0 0
        %253 = vperm.xlu0 %252, %v237
        %v254 = vpop.permute.xlu0 %253
        %v256 = vunpack.c.l.s4 839922192
        %v257 = vunpack.c.0.s8 %v256
        %v258 = vlaneseq
        %v259 = vshrl.u32 %v258, 7
        %v260 = vsub.s32 %v257, %v259
        %v261 = vrot.slane %v254, %v260
        %v263 = vadd.f32 %v250, %v261
        %264 = vst [vmem:[%s186] sm:$0xff] %v263
        %s265 = sand.u32 %s96, 1
        %s266 = scalar_lea.sflag [#allocation4], %s265
        %s267 = sand.u32 %s96, 1
        %s268 = smul.addr %s267, 8
        %s269 = scalar_lea.vmem [#allocation5], %s268
        // Predicated region
        $region37: #{tpu_custom_call.1} parent=31 // pred_check
          %p270 = pneg %p106
        $region38: #{tpu_custom_call.1} parent=31 // pred_check_branch
          %272 = sbr.rel (%p270) target = $region40
        $region39: #{tpu_custom_call.1} parent=31 // pred_region
          %s274 = ssub.s32 128, 128
          %275 = vsyncadd %s266, %s274
          %s276 = smul.addr %s20, 2
          %s277 = smul.addr %s276, 64
          %s278 = scalar_lea.hbm %s3, %s277
          %s280 = sshll.u32 %s269, 4
          %s281 = int_to_ptr.vmem [resolvable:$true] %s280
          %283 = dma.vmem_to_hbm [thread:$0]  %s281, 128, %s278, %s266
        $region40: #{tpu_custom_call.1} parent=31 // pred_fallthru
          _
      $region32: #{tpu_custom_call.1} parent=5 // pred_fallthru
        _
      %p284 = scmp.le.s32.totalorder 2, %s15
      // Predicated region
      $region41: #{tpu_custom_call.1} parent=5 // pred_check
        %p285 = pneg %p284
      $region42: #{tpu_custom_call.1} parent=5 // pred_check_branch
        %287 = sbr.rel (%p285) target = $region44
      $region43: #{tpu_custom_call.1} parent=5 // pred_region
        %s288 = ssub.s32 %s15, 2
        // Predicated region
        $region45: #{tpu_custom_call.1} parent=43 // pred_check
          %p289 = pneg %p112
        $region46: #{tpu_custom_call.1} parent=43 // pred_check_branch
          %291 = sbr.rel (%p289) target = $region48
        $region47: #{tpu_custom_call.1} parent=43 // pred_region
          %s292 = sand.u32 %s97, 1
          %s293 = scalar_lea.sflag [#allocation4], %s292
          %s294 = sand.u32 %s97, 1
          %s295 = smul.addr %s294, 8
          %s296 = scalar_lea.vmem [#allocation5], %s295
          %297 = dma.done %s293, 128
        $region48: #{tpu_custom_call.1} parent=43 // pred_fallthru
          _
      $region44: #{tpu_custom_call.1} parent=5 // pred_fallthru
        _
    $region6: #{tpu_custom_call.1} parent=1 // loop_footer
      %s19 = sadd.s32 1, %s15
    $region7: #{tpu_custom_call.1} parent=1 // loop_footer_branch
      %14 = sbr.rel target = $region3
    $region8: #{tpu_custom_call.1} parent=1 // loop_exit
      _
    %298 = vsyncpa [#allocation3], 1
    %s299 = scalar_lea.sflag [#allocation3], 1
    %300 = vsyncpa %s299, 1
    %301 = vsyncpa [#allocation4], 1
    %s302 = scalar_lea.sflag [#allocation4], 1
    %303 = vsyncpa %s302, 1

</llo_original>
